<compile_context>
chip_gen: v7x
topology: tpu7x:2x2x1
jax: 0.10.0
libtpu: 0.0.40
codegen_flags: <defaults>
</compile_context>

<pallas_src>
import jax
import jax.numpy as jnp
from jax import lax
from jax.experimental import pallas as pl
from jax.experimental.pallas import tpu as pltpu

_H1_PAD = 128    # Linear(in, 64)  padded to 128 lanes
_H2_PAD = 128    # Linear(64, 32)  padded to 128 lanes
_OUT_PAD = 128   # Linear(32, 2)   padded to 128 lanes inside the kernel only
_N_OUT = 2
_EPS = 1e-5


def churn_kernel(x_ref, w1_ref, b1_ref, w2_ref, b2_ref, w3_ref, b3_ref, out_ref):
    # BatchNorm already folded into (w1, b1); dropout is identity at inference.
    x = x_ref[...]                                                        # (TB, D) f32
    # Layer 1 in f32: keeps the BN-folded weights un-quantized; compute is negligible.
    h1 = jnp.dot(x, w1_ref[...], preferred_element_type=jnp.float32) + b1_ref[...]
    h1 = jnp.maximum(h1, 0.0)                                             # (TB, 128) f32
    h2 = jnp.dot(h1.astype(jnp.bfloat16), w2_ref[...],
                 preferred_element_type=jnp.float32) + b2_ref[...]
    h2 = jnp.maximum(h2, 0.0)                                             # (TB, 128) f32
    out = jnp.dot(h2.astype(jnp.bfloat16), w3_ref[...],
                  preferred_element_type=jnp.float32) + b3_ref[...]       # (TB, 128) f32
    # Only the 2 real logit lanes go back to HBM (masked store, full-width DMA avoided).
    out_ref[...] = out[:, :_N_OUT]                                        # (TB, 2) f32


def _round_up(n, m):
    return ((n + m - 1) // m) * m


def _pad_to(a, shape):
    out = jnp.zeros(shape, a.dtype)
    return out.at[: a.shape[0], : a.shape[1]].set(a)


def prepare_params(p, eps=_EPS):
    """Host-side prep: fold BN into layer 1, zero-pad to 128 lanes; w2/w3 in bf16."""
    D = p["w1"].shape[0]
    scale = p["gamma"] * lax.rsqrt(p["var"] + eps)        # (1, D)
    shift = p["beta"] - p["mean"] * scale                 # (1, D)
    w1 = p["w1"] * scale.reshape(D, 1)                    # fold BN scale into rows of w1
    b1 = p["b1"] + shift @ p["w1"]                        # fold BN shift into bias

    w1p = _pad_to(w1, (D, _H1_PAD)).astype(jnp.float32)       # layer 1 stays f32
    b1p = _pad_to(b1, (1, _H1_PAD)).astype(jnp.float32)       # padded bias lanes = 0
    w2p = _pad_to(p["w2"], (_H1_PAD, _H2_PAD)).astype(jnp.bfloat16)
    b2p = _pad_to(p["b2"], (1, _H2_PAD)).astype(jnp.float32)
    w3p = _pad_to(p["w3"], (_H2_PAD, _OUT_PAD)).astype(jnp.bfloat16)
    b3p = _pad_to(p["b3"], (1, _OUT_PAD)).astype(jnp.float32)
    return w1p, b1p, w2p, b2p, w3p, b3p


def churn_net_pallas(x, params, *, batch_tile=4096, eps=_EPS):
    B, D = x.shape
    w1, b1, w2, b2, w3, b3 = prepare_params(params, eps)

    # Batch tile: multiple of 8 sublanes; clamp so the grid has >= 2 steps when B allows
    # (v7x has 2 TensorCores, "parallel" axis shards across them). Ragged last tile is
    # handled by Pallas edge masking — no host-side padding of x.
    tb = max(8, min(batch_tile, _round_up(pl.cdiv(B, 2), 8)))
    grid_b = pl.cdiv(B, tb)

    const = lambda i: (0, 0)   # weights/biases stay VMEM-resident across grid steps
    flops = 2 * B * (D * _H1_PAD + _H1_PAD * _H2_PAD + _H2_PAD * _OUT_PAD)
    bytes_accessed = (x.size * x.dtype.itemsize            # x read once (f32, no recast pass)
                      + B * _N_OUT * 4                      # narrow output writeback
                      + sum(int(a.size) * a.dtype.itemsize
                            for a in (w1, b1, w2, b2, w3, b3)))

    out = pl.pallas_call(
        churn_kernel,
        out_shape=jax.ShapeDtypeStruct((B, _N_OUT), jnp.float32),
        grid=(grid_b,),
        in_specs=[
            pl.BlockSpec((tb, D), lambda i: (i, 0)),
            pl.BlockSpec((D, _H1_PAD), const),
            pl.BlockSpec((1, _H1_PAD), const),
            pl.BlockSpec((_H1_PAD, _H2_PAD), const),
            pl.BlockSpec((1, _H2_PAD), const),
            pl.BlockSpec((_H2_PAD, _OUT_PAD), const),
            pl.BlockSpec((1, _OUT_PAD), const),
        ],
        out_specs=pl.BlockSpec((tb, _N_OUT), lambda i: (i, 0)),
        compiler_params=pltpu.CompilerParams(
            dimension_semantics=("parallel",),
            vmem_limit_bytes=32 << 20),
        cost_estimate=pl.CostEstimate(flops=flops, transcendentals=0,
                                      bytes_accessed=bytes_accessed),
    )(x.astype(jnp.float32), w1, b1, w2, b2, w3, b3)

    return out


def churn_net_ref(x, p, eps=_EPS):
    """Pure-f32 reference of the exact PyTorch eval-mode math."""
    xn = (x - p["mean"]) * lax.rsqrt(p["var"] + eps) * p["gamma"] + p["beta"]
    h1 = jnp.maximum(xn @ p["w1"] + p["b1"], 0.0)
    h2 = jnp.maximum(h1 @ p["w2"] + p["b2"], 0.0)
    return h2 @ p["w3"] + p["b3"]   # dropout = identity in eval mode


def churn_net_ref_matched(x, params, eps=_EPS):
    """Same math as the kernel (f32 layer 1, bf16 operands for layers 2/3, f32 accumulate)."""
    w1, b1, w2, b2, w3, b3 = prepare_params(params, eps)
    h1 = jnp.maximum(x.astype(jnp.float32) @ w1 + b1, 0.0)
    h2 = jnp.dot(h1.astype(jnp.bfloat16), w2, preferred_element_type=jnp.float32) + b2
    h2 = jnp.maximum(h2, 0.0)
    out = jnp.dot(h2.astype(jnp.bfloat16), w3, preferred_element_type=jnp.float32) + b3
    return out[:, :_N_OUT]


def init_params(key, input_dim):
    """Deterministic init mimicking PyTorch defaults (uniform +-1/sqrt(fan_in))."""
    ks = jax.random.split(key, 9)

    def lin(kw, kb, fan_in, fan_out):
        bound = 1.0 / jnp.sqrt(jnp.float32(fan_in))
        w = jax.random.uniform(kw, (fan_in, fan_out), jnp.float32, -bound, bound)
        b = jax.random.uniform(kb, (1, fan_out), jnp.float32, -bound, bound)
        return w, b

    w1, b1 = lin(ks[0], ks[1], input_dim, 64)
    w2, b2 = lin(ks[2], ks[3], 64, 32)
    w3, b3 = lin(ks[4], ks[5], 32, 2)

    gamma = 1.0 + 0.1 * jax.random.normal(ks[6], (1, input_dim), jnp.float32)
    beta = 0.1 * jax.random.normal(ks[7], (1, input_dim), jnp.float32)
    mean = 0.2 * jax.random.normal(ks[8], (1, input_dim), jnp.float32)
    var = jnp.ones((1, input_dim), jnp.float32) * 0.9

    return dict(gamma=gamma, beta=beta, mean=mean, var=var,
                w1=w1, b1=b1, w2=w2, b2=b2, w3=w3, b3=b3)


if __name__ == "__main__":
    key = jax.random.PRNGKey(0)
    k_x, k_p, k_x2 = jax.random.split(key, 3)

    batch, input_dim = 8, 16
    params = init_params(k_p, input_dim)

    # Small smoke test.
    x = jax.random.normal(k_x, (batch, input_dim), jnp.float32)
    out = jax.block_until_ready(churn_net_pallas(x, params))
    assert out.shape == (batch, _N_OUT)
    assert jnp.allclose(out, churn_net_ref_matched(x, params), atol=1e-3, rtol=1e-3), \
        "small batch: mismatch vs matched-precision reference"
    assert jnp.allclose(out, churn_net_ref(x, params), atol=5e-2, rtol=5e-2), \
        "small batch: mismatch vs f32 reference"

    # Larger ragged batch: exercises >=2 parallel grid steps + masked edge block.
    big_batch = 1000
    x2 = jax.random.normal(k_x2, (big_batch, input_dim), jnp.float32)
    out2 = jax.block_until_ready(churn_net_pallas(x2, params))
    assert out2.shape == (big_batch, _N_OUT)
    assert jnp.allclose(out2, churn_net_ref_matched(x2, params), atol=1e-3, rtol=1e-3), \
        "large batch: mismatch vs matched-precision reference"
    assert jnp.allclose(out2, churn_net_ref(x2, params), atol=5e-2, rtol=5e-2), \
        "large batch: mismatch vs f32 reference"

    print("KERNEL_OK")
</pallas_src>

<mosaic_0001>
module attributes {stable_mosaic.version = 11 : i64} {
  func.func @churn_kernel(%arg0: i32, %arg1: memref<8x16xf32, #tpu.memory_space<vmem>>, %arg2: memref<16x128xf32, #tpu.memory_space<vmem>>, %arg3: memref<1x128xf32, #tpu.memory_space<vmem>>, %arg4: memref<128x128xbf16, #tpu.memory_space<vmem>>, %arg5: memref<1x128xf32, #tpu.memory_space<vmem>>, %arg6: memref<128x128xbf16, #tpu.memory_space<vmem>>, %arg7: memref<1x128xf32, #tpu.memory_space<vmem>>, %arg8: memref<8x2xf32, #tpu.memory_space<vmem>>) attributes {dimension_semantics = [#tpu.dimension_semantics<parallel>], iteration_bounds = array<i64: 1>, scalar_prefetch = 0 : i64, scratch_operands = 0 : i64, tpu.core_type = #tpu.core_type<tc>, window_params = [{transform_indices = @transform_0, window_bounds = array<i64: 8, 16>}, {pipeline_mode = #tpu.pipeline_mode<synchronous>, transform_indices = @transform_1, window_bounds = array<i64: 16, 128>}, {pipeline_mode = #tpu.pipeline_mode<synchronous>, transform_indices = @transform_2, window_bounds = array<i64: 1, 128>}, {pipeline_mode = #tpu.pipeline_mode<synchronous>, transform_indices = @transform_3, window_bounds = array<i64: 128, 128>}, {pipeline_mode = #tpu.pipeline_mode<synchronous>, transform_indices = @transform_4, window_bounds = array<i64: 1, 128>}, {pipeline_mode = #tpu.pipeline_mode<synchronous>, transform_indices = @transform_5, window_bounds = array<i64: 128, 128>}, {pipeline_mode = #tpu.pipeline_mode<synchronous>, transform_indices = @transform_6, window_bounds = array<i64: 1, 128>}, {transform_indices = @transform_7, window_bounds = array<i64: 8, 2>}]} {
    %c0 = arith.constant 0 : index
    %c0_0 = arith.constant 0 : index
    %0 = vector.load %arg1[%c0, %c0_0] : memref<8x16xf32, #tpu.memory_space<vmem>>, vector<8x16xf32>
    %c0_1 = arith.constant 0 : index
    %c0_2 = arith.constant 0 : index
    %1 = vector.load %arg2[%c0_1, %c0_2] : memref<16x128xf32, #tpu.memory_space<vmem>>, vector<16x128xf32>
    %cst = arith.constant dense<0.000000e+00> : vector<8x128xf32>
    %2 = tpu.matmul %0, %1, %cst {dimension_numbers = #tpu.dot_dimension_numbers<[1], [0], [0], [1], [0, 0, 1, 1], [], []>} : vector<8x16xf32>, vector<16x128xf32>, vector<8x128xf32> -> vector<8x128xf32>
    %c0_3 = arith.constant 0 : index
    %c0_4 = arith.constant 0 : index
    %3 = vector.load %arg3[%c0_3, %c0_4] : memref<1x128xf32, #tpu.memory_space<vmem>>, vector<1x128xf32>
    %4 = vector.broadcast %3 : vector<1x128xf32> to vector<8x128xf32>
    %5 = arith.addf %2, %4 : vector<8x128xf32>
    %cst_5 = arith.constant 0.000000e+00 : f32
    %6 = vector.broadcast %cst_5 : f32 to vector<8x128xf32>
    %7 = arith.maximumf %5, %6 : vector<8x128xf32>
    %8 = arith.truncf %7 : vector<8x128xf32> to vector<8x128xbf16>
    %c0_6 = arith.constant 0 : index
    %c0_7 = arith.constant 0 : index
    %9 = vector.load %arg4[%c0_6, %c0_7] : memref<128x128xbf16, #tpu.memory_space<vmem>>, vector<128x128xbf16>
    %cst_8 = arith.constant dense<0.000000e+00> : vector<8x128xf32>
    %10 = tpu.matmul %8, %9, %cst_8 {dimension_numbers = #tpu.dot_dimension_numbers<[1], [0], [0], [1], [0, 0, 1, 1], [], []>} : vector<8x128xbf16>, vector<128x128xbf16>, vector<8x128xf32> -> vector<8x128xf32>
    %c0_9 = arith.constant 0 : index
    %c0_10 = arith.constant 0 : index
    %11 = vector.load %arg5[%c0_9, %c0_10] : memref<1x128xf32, #tpu.memory_space<vmem>>, vector<1x128xf32>
    %12 = vector.broadcast %11 : vector<1x128xf32> to vector<8x128xf32>
    %13 = arith.addf %10, %12 : vector<8x128xf32>
    %cst_11 = arith.constant 0.000000e+00 : f32
    %14 = vector.broadcast %cst_11 : f32 to vector<8x128xf32>
    %15 = arith.maximumf %13, %14 : vector<8x128xf32>
    %16 = arith.truncf %15 : vector<8x128xf32> to vector<8x128xbf16>
    %c0_12 = arith.constant 0 : index
    %c0_13 = arith.constant 0 : index
    %17 = vector.load %arg6[%c0_12, %c0_13] : memref<128x128xbf16, #tpu.memory_space<vmem>>, vector<128x128xbf16>
    %cst_14 = arith.constant dense<0.000000e+00> : vector<8x128xf32>
    %18 = tpu.matmul %16, %17, %cst_14 {dimension_numbers = #tpu.dot_dimension_numbers<[1], [0], [0], [1], [0, 0, 1, 1], [], []>} : vector<8x128xbf16>, vector<128x128xbf16>, vector<8x128xf32> -> vector<8x128xf32>
    %c0_15 = arith.constant 0 : index
    %c0_16 = arith.constant 0 : index
    %19 = vector.load %arg7[%c0_15, %c0_16] : memref<1x128xf32, #tpu.memory_space<vmem>>, vector<1x128xf32>
    %20 = vector.broadcast %19 : vector<1x128xf32> to vector<8x128xf32>
    %21 = arith.addf %18, %20 : vector<8x128xf32>
    %22 = vector.extract_strided_slice %21 {offsets = [0, 0], sizes = [8, 2], strides = [1, 1]} : vector<8x128xf32> to vector<8x2xf32>
    %c0_17 = arith.constant 0 : index
    %c0_18 = arith.constant 0 : index
    %23 = vector.load %arg8[%c0_17, %c0_18] : memref<8x2xf32, #tpu.memory_space<vmem>>, vector<8x2xf32>
    tpu.vector_store %arg8[%c0_17, %c0_18], %22 {strides = array<i32>} : memref<8x2xf32, #tpu.memory_space<vmem>>, vector<8x2xf32>,
    return
  }
  func.func @transform_0(%arg0: i32) -> (i32, i32) {
    %c0_i32 = arith.constant 0 : i32
    %c0_i32_0 = arith.constant 0 : i32
    return %arg0, %c0_i32 : i32, i32
  }
  func.func @transform_1(%arg0: i32) -> (i32, i32) {
    %c0_i32 = arith.constant 0 : i32
    %c0_i32_0 = arith.constant 0 : i32
    %c0_i32_1 = arith.constant 0 : i32
    return %c0_i32, %c0_i32_0 : i32, i32
  }
  func.func @transform_2(%arg0: i32) -> (i32, i32) {
    %c0_i32 = arith.constant 0 : i32
    %c0_i32_0 = arith.constant 0 : i32
    %c0_i32_1 = arith.constant 0 : i32
    return %c0_i32, %c0_i32_0 : i32, i32
  }
  func.func @transform_3(%arg0: i32) -> (i32, i32) {
    %c0_i32 = arith.constant 0 : i32
    %c0_i32_0 = arith.constant 0 : i32
    %c0_i32_1 = arith.constant 0 : i32
    return %c0_i32, %c0_i32_0 : i32, i32
  }
  func.func @transform_4(%arg0: i32) -> (i32, i32) {
    %c0_i32 = arith.constant 0 : i32
    %c0_i32_0 = arith.constant 0 : i32
    %c0_i32_1 = arith.constant 0 : i32
    return %c0_i32, %c0_i32_0 : i32, i32
  }
  func.func @transform_5(%arg0: i32) -> (i32, i32) {
    %c0_i32 = arith.constant 0 : i32
    %c0_i32_0 = arith.constant 0 : i32
    %c0_i32_1 = arith.constant 0 : i32
    return %c0_i32, %c0_i32_0 : i32, i32
  }
  func.func @transform_6(%arg0: i32) -> (i32, i32) {
    %c0_i32 = arith.constant 0 : i32
    %c0_i32_0 = arith.constant 0 : i32
    %c0_i32_1 = arith.constant 0 : i32
    return %c0_i32, %c0_i32_0 : i32, i32
  }
  func.func @transform_7(%arg0: i32) -> (i32, i32) {
    %c0_i32 = arith.constant 0 : i32
    %c0_i32_0 = arith.constant 0 : i32
    return %arg0, %c0_i32 : i32, i32
  }
}

</mosaic_0001>

<llo_original>
// kernel: tpu_custom_call.1
$region0: #{tpu_custom_call.1}
  #allocation0 [shape = 'u32[]', space=smem, size = 0x4, offset = 0x4, fixed_abs, tag = 'smem constant byte address 0x4 - core index']
  #allocation1 [shape = 'u32[144,128]{1,0:T(1,128)}', space=vmem, size = 0x12000, scoped, tag = 'internal scratch']
  %s0 = inlined_call_operand.hbm [shape: f32[8,16], index: 0, kind: input, shape index: {}]
  %s1 = inlined_call_operand.hbm [shape: f32[16,128], index: 1, kind: input, shape index: {}]
  %s2 = inlined_call_operand.vmem [shape: f32[1,128], index: 2, kind: input, shape index: {}]
  %s3 = inlined_call_operand.hbm [shape: bf16[128,128], index: 3, kind: input, shape index: {}]
  %s4 = inlined_call_operand.vmem [shape: f32[1,128], index: 4, kind: input, shape index: {}]
  %s5 = inlined_call_operand.hbm [shape: bf16[128,128], index: 5, kind: input, shape index: {}]
  %s6 = inlined_call_operand.vmem [shape: f32[1,128], index: 6, kind: input, shape index: {}]
  %s7 = inlined_call_operand.vmem [shape: f32[8,2], index: 7, kind: output, shape index: {}]
  %s8 = sld [smem:[#allocation0]]
  $region54: #{tpu_custom_call.1} parent=0
    _
  %s10 = ssub.s32 1, %s8
  %s11 = scalar_select 0, %s10, %s8
  $region1: #{tpu_custom_call.1} parent=0
    #allocation2 [shape = 'u8[4096]{0}', space=vmem, size = 0x1000, scoped, tag = 'input window, operand 0, single buffered']
    #allocation3 [shape = 's32[1]{0}', space=sflag, size = 0x4, scoped, tag = 'scoped memory for tpu_custom_call.1']
    #allocation4 [shape = 'u8[8192]{0}', space=vmem, size = 0x2000, scoped, tag = 'input window, operand 1, single buffered']
    #allocation5 [shape = 's32[1]{0}', space=sflag, size = 0x4, scoped, tag = 'scoped memory for tpu_custom_call.1']
    #allocation6 [shape = 'u8[32768]{0}', space=vmem, size = 0x8000, scoped, tag = 'input window, operand 3, single buffered']
    #allocation7 [shape = 'u8[32768]{0}', space=vmem, size = 0x8000, scoped, tag = 'input window, operand 5, single buffered']
    #allocation8 [shape = 's32[1]{0}', space=sflag, size = 0x4, scoped, tag = 'scoped memory for tpu_custom_call.1']
    %12 = vsyncpa [#allocation3], 0
    %13 = vsyncpa [#allocation5], 0
    %14 = vsyncpa [#allocation8], 0
    // Predicated region
    $region2: #{tpu_custom_call.1} parent=1 // pred_check
      _
    $region3: #{tpu_custom_call.1} parent=1 // pred_check_branch
      %16 = sbr.rel (0) target = $region5
    $region4: #{tpu_custom_call.1} parent=1 // pred_region
      %s18 = ssub.s32 128, 128
      %19 = vsyncadd [#allocation3], %s18
      %s21 = sshll.u32 [#allocation2], 4
      %s22 = int_to_ptr.vmem [resolvable:$true] %s21
      %24 = dma.hbm_to_vmem [thread:$0]  %s0, 128, %s22, [#allocation3]
    $region5: #{tpu_custom_call.1} parent=1 // pred_fallthru
      _
    // Predicated region
    $region6: #{tpu_custom_call.1} parent=1 // pred_check
      _
    $region7: #{tpu_custom_call.1} parent=1 // pred_check_branch
      %26 = sbr.rel (0) target = $region9
    $region8: #{tpu_custom_call.1} parent=1 // pred_region
      %s28 = ssub.s32 256, 256
      %29 = vsyncadd [#allocation5], %s28
      %s30 = sshll.u32 [#allocation4], 4
      %s31 = int_to_ptr.vmem [resolvable:$true] %s30
      %36 = dma.hbm_to_vmem [thread:$0]  %s1, 256, %s31, [#allocation5], 128, 128, 8
    $region9: #{tpu_custom_call.1} parent=1 // pred_fallthru
      _
    // Predicated region
    $region10: #{tpu_custom_call.1} parent=1 // pred_check
      _
    $region11: #{tpu_custom_call.1} parent=1 // pred_check_branch
      %38 = sbr.rel (0) target = $region13
    $region12: #{tpu_custom_call.1} parent=1 // pred_region
      _
    $region13: #{tpu_custom_call.1} parent=1 // pred_fallthru
      _
    // Predicated region
    $region14: #{tpu_custom_call.1} parent=1 // pred_check
      _
    $region15: #{tpu_custom_call.1} parent=1 // pred_check_branch
      %40 = sbr.rel (0) target = $region17
    $region16: #{tpu_custom_call.1} parent=1 // pred_region
      %s42 = ssub.s32 1024, 1024
      %43 = vsyncadd [#allocation5], %s42
      %s44 = sshll.u32 [#allocation6], 4
      %s45 = int_to_ptr.vmem [resolvable:$true] %s44
      %50 = dma.hbm_to_vmem [thread:$0]  %s3, 1024, %s45, [#allocation5], 64, 64, 4
    $region17: #{tpu_custom_call.1} parent=1 // pred_fallthru
      _
    // Predicated region
    $region18: #{tpu_custom_call.1} parent=1 // pred_check
      _
    $region19: #{tpu_custom_call.1} parent=1 // pred_check_branch
      %52 = sbr.rel (0) target = $region21
    $region20: #{tpu_custom_call.1} parent=1 // pred_region
      _
    $region21: #{tpu_custom_call.1} parent=1 // pred_fallthru
      _
    // Predicated region
    $region22: #{tpu_custom_call.1} parent=1 // pred_check
      _
    $region23: #{tpu_custom_call.1} parent=1 // pred_check_branch
      %54 = sbr.rel (0) target = $region25
    $region24: #{tpu_custom_call.1} parent=1 // pred_region
      %s56 = ssub.s32 1024, 1024
      %57 = vsyncadd [#allocation8], %s56
      %s58 = sshll.u32 [#allocation7], 4
      %s59 = int_to_ptr.vmem [resolvable:$true] %s58
      %64 = dma.hbm_to_vmem [thread:$0]  %s5, 1024, %s59, [#allocation8], 64, 64, 4
    $region25: #{tpu_custom_call.1} parent=1 // pred_fallthru
      _
    // Predicated region
    $region26: #{tpu_custom_call.1} parent=1 // pred_check
      _
    $region27: #{tpu_custom_call.1} parent=1 // pred_check_branch
      %66 = sbr.rel (0) target = $region29
    $region28: #{tpu_custom_call.1} parent=1 // pred_region
      _
    $region29: #{tpu_custom_call.1} parent=1 // pred_fallthru
      _
    // Predicated region
    $region30: #{tpu_custom_call.1} parent=1 // pred_check
      _
    $region31: #{tpu_custom_call.1} parent=1 // pred_check_branch
      %68 = sbr.rel (0) target = $region33
    $region32: #{tpu_custom_call.1} parent=1 // pred_region
      %69 = dma.done [#allocation3], 128
    $region33: #{tpu_custom_call.1} parent=1 // pred_fallthru
      _
    // Predicated region
    $region34: #{tpu_custom_call.1} parent=1 // pred_check
      _
    $region35: #{tpu_custom_call.1} parent=1 // pred_check_branch
      %71 = sbr.rel (0) target = $region37
    $region36: #{tpu_custom_call.1} parent=1 // pred_region
      %72 = dma.done [#allocation5], 256
    $region37: #{tpu_custom_call.1} parent=1 // pred_fallthru
      _
    // Predicated region
    $region38: #{tpu_custom_call.1} parent=1 // pred_check
      _
    $region39: #{tpu_custom_call.1} parent=1 // pred_check_branch
      %74 = sbr.rel (0) target = $region41
    $region40: #{tpu_custom_call.1} parent=1 // pred_region
      %75 = dma.done [#allocation5], 1024
    $region41: #{tpu_custom_call.1} parent=1 // pred_fallthru
      _
    // Predicated region
    $region42: #{tpu_custom_call.1} parent=1 // pred_check
      _
    $region43: #{tpu_custom_call.1} parent=1 // pred_check_branch
      %77 = sbr.rel (0) target = $region45
    $region44: #{tpu_custom_call.1} parent=1 // pred_region
      %78 = dma.done [#allocation8], 1024
    $region45: #{tpu_custom_call.1} parent=1 // pred_fallthru
      _
    %v80 = vld [vmem:[#allocation2] sm:$0xff]
    %v81 = vld [vmem:[#allocation4] sm:$0xff]
    %v82 = vld [vmem:[#allocation4 + $0x8] sm:$0xff]
    %v83 = vld [vmem:[%s2] sm:$0x1]
    %v85 = vlaneseq
    %v86 = vshrl.u32 %v85, 7
    %v87 = vsub.s32 0, %v86
    %v88 = vrot.slane %v83, %v87
    %vm90 = vcmask 130048
    %v92 = vsel %vm90, %v80, 0
    %94 = vmatprep.subr.mxu0 0.0
    %95 = vmatpush1.msra.mxu0 %v81
    %96 = vmatprep.subr.mxu0 0.0
    %97 = vmatpush1.msra.mxu0 %v82
    %98 = vmatprep.subr.mxu0 0.0
    %99 = vmatpush1.msra.mxu0 0.0
    %100 = vmatprep.subr.mxu0 0.0
    %101 = vmatpush1.msra.mxu0 0.0
    %102 = vmatprep.subr.mxu0 0.0
    %103 = vmatpush1.msra.mxu0 0.0
    %104 = vmatprep.subr.mxu0 0.0
    %105 = vmatpush1.msra.mxu0 0.0
    %106 = vmatprep.subr.mxu0 0.0
    %107 = vmatpush1.msra.mxu0 0.0
    %108 = vmatprep.subr.mxu0 0.0
    %109 = vmatpush1.msra.mxu0 0.0
    %110 = vmatprep.subr.mxu0 0.0
    %111 = vmatpush1.msra.mxu0 0.0
    %112 = vmatprep.subr.mxu0 0.0
    %113 = vmatpush1.msra.mxu0 0.0
    %114 = vmatprep.subr.mxu0 0.0
    %115 = vmatpush1.msra.mxu0 0.0
    %116 = vmatprep.subr.mxu0 0.0
    %117 = vmatpush1.msra.mxu0 0.0
    %118 = vmatprep.subr.mxu0 0.0
    %119 = vmatpush1.msra.mxu0 0.0
    %120 = vmatprep.subr.mxu0 0.0
    %121 = vmatpush1.msra.mxu0 0.0
    %122 = vmatprep.subr.mxu0 0.0
    %123 = vmatpush1.msra.mxu0 0.0
    %124 = vmatprep.subr.mxu0 0.0
    %125 = vmatpush1.msra.mxu0 0.0
    %126 = vmatprep.subr.mxu0 0.0
    %127 = vmatpush1.msra.mxu0 0.0
    %128 = vmatprep.subr.mxu0 0.0
    %129 = vmatpush1.msra.mxu0 0.0
    %130 = vmatprep.subr.mxu0 0.0
    %131 = vmatpush1.msra.mxu0 0.0
    %132 = vmatprep.subr.mxu0 0.0
    %133 = vmatpush1.msra.mxu0 0.0
    %134 = vmatprep.subr.mxu0 0.0
    %135 = vmatpush1.msra.mxu0 0.0
    %136 = vmatprep.subr.mxu0 0.0
    %137 = vmatpush1.msra.mxu0 0.0
    %138 = vmatprep.subr.mxu0 0.0
    %139 = vmatpush1.msra.mxu0 0.0
    %140 = vmatprep.subr.mxu0 0.0
    %141 = vmatpush1.msra.mxu0 0.0
    %142 = vmatprep.subr.mxu0 0.0
    %143 = vmatpush1.msra.mxu0 0.0
    %144 = vmatprep.subr.mxu0 0.0
    %145 = vmatpush1.msra.mxu0 0.0
    %146 = vmatprep.subr.mxu0 0.0
    %147 = vmatpush1.msra.mxu0 0.0
    %148 = vmatprep.subr.mxu0 0.0
    %149 = vmatpush1.msra.mxu0 0.0
    %150 = vmatprep.subr.mxu0 0.0
    %151 = vmatpush1.msra.mxu0 0.0
    %152 = vmatprep.subr.mxu0 0.0
    %153 = vmatpush1.msra.mxu0 0.0
    %154 = vmatprep.subr.mxu0 0.0
    %155 = vmatpush1.msra.mxu0 0.0
    %156 = vmatprep.subr.mxu0 0.0
    %157 = vmatpush1.msra.mxu0 0.0
    %158 = vmatprep.mubr.f32.mxu0 0.0
    %159 = vmatmul.mubr.f32.gmra.mrb[0].mxu0 %v92
    %v160 = vpop.f32.mrb[0].mxu0
    %v161 = vadd.f32 %v88, %v160
    %v162 = vpop.f32.mrb[0].mxu0
    %163 = vdwg.mxu0
    %v164 = vmax.f32 %v161, 0.0
    %v165 = vpack.c.bf16 %v164, %v164
    %v166 = vld [vmem:[#allocation6] sm:$0xf]
    %v167 = vld [vmem:[#allocation6 + $0x4] sm:$0xf]
    %v168 = vld [vmem:[#allocation6 + $0x8] sm:$0xf]
    %v169 = vld [vmem:[#allocation6 + $0xc] sm:$0xf]
    %v170 = vld [vmem:[#allocation6 + $0x10] sm:$0xf]
    %v171 = vld [vmem:[#allocation6 + $0x14] sm:$0xf]
    %v172 = vld [vmem:[#allocation6 + $0x18] sm:$0xf]
    %v173 = vld [vmem:[#allocation6 + $0x1c] sm:$0xf]
    %v174 = vld [vmem:[#allocation6 + $0x20] sm:$0xf]
    %v175 = vld [vmem:[#allocation6 + $0x24] sm:$0xf]
    %v176 = vld [vmem:[#allocation6 + $0x28] sm:$0xf]
    %v177 = vld [vmem:[#allocation6 + $0x2c] sm:$0xf]
    %v178 = vld [vmem:[#allocation6 + $0x30] sm:$0xf]
    %v179 = vld [vmem:[#allocation6 + $0x34] sm:$0xf]
    %v180 = vld [vmem:[#allocation6 + $0x38] sm:$0xf]
    %v181 = vld [vmem:[#allocation6 + $0x3c] sm:$0xf]
    %v182 = vld [vmem:[%s4] sm:$0x1]
    %v184 = vlaneseq
    %v185 = vshrl.u32 %v184, 7
    %v186 = vsub.s32 0, %v185
    %v187 = vrot.slane %v182, %v186
    %v205 = vunpack.c.l.b16 %v166
    %v206 = vunpack.c.l.b16 %v167
    %v207 = vunpack.c.l.b16 %v168
    %v208 = vunpack.c.l.b16 %v169
    %v209 = vunpack.c.l.b16 %v170
    %v210 = vunpack.c.l.b16 %v171
    %v211 = vunpack.c.l.b16 %v172
    %v212 = vunpack.c.l.b16 %v173
    %v213 = vunpack.c.l.b16 %v174
    %v214 = vunpack.c.l.b16 %v175
    %v215 = vunpack.c.l.b16 %v176
    %v216 = vunpack.c.l.b16 %v177
    %v217 = vunpack.c.l.b16 %v178
    %v218 = vunpack.c.l.b16 %v179
    %v219 = vunpack.c.l.b16 %v180
    %v220 = vunpack.c.l.b16 %v181
    %v221 = vpack.c.b16 %v206, %v205
    %v222 = vpack.c.b16 %v208, %v207
    %v223 = vpack.c.b16 %v210, %v209
    %v224 = vpack.c.b16 %v212, %v211
    %v225 = vpack.c.b16 %v214, %v213
    %v226 = vpack.c.b16 %v216, %v215
    %v227 = vpack.c.b16 %v218, %v217
    %v228 = vpack.c.b16 %v220, %v219
    %237 = vmatprep.subr.bf16.mxu0 0
    %238 = vmatpush1.bf16.msra.mxu0 %v221
    %239 = vmatprep.subr.bf16.mxu0 0
    %240 = vmatpush1.bf16.msra.mxu0 %v222
    %241 = vmatprep.subr.bf16.mxu0 0
    %242 = vmatpush1.bf16.msra.mxu0 %v223
    %243 = vmatprep.subr.bf16.mxu0 0
    %244 = vmatpush1.bf16.msra.mxu0 %v224
    %245 = vmatprep.subr.bf16.mxu0 0
    %246 = vmatpush1.bf16.msra.mxu0 %v225
    %247 = vmatprep.subr.bf16.mxu0 0
    %248 = vmatpush1.bf16.msra.mxu0 %v226
    %249 = vmatprep.subr.bf16.mxu0 0
    %250 = vmatpush1.bf16.msra.mxu0 %v227
    %251 = vmatprep.subr.bf16.mxu0 0
    %252 = vmatpush1.bf16.msra.mxu0 %v228
    %253 = vmatprep.subr.bf16.mxu0 0
    %254 = vmatpush1.bf16.msra.mxu0 0
    %255 = vmatprep.subr.bf16.mxu0 0
    %256 = vmatpush1.bf16.msra.mxu0 0
    %257 = vmatprep.subr.bf16.mxu0 0
    %258 = vmatpush1.bf16.msra.mxu0 0
    %259 = vmatprep.subr.bf16.mxu0 0
    %260 = vmatpush1.bf16.msra.mxu0 0
    %261 = vmatprep.subr.bf16.mxu0 0
    %262 = vmatpush1.bf16.msra.mxu0 0
    %263 = vmatprep.subr.bf16.mxu0 0
    %264 = vmatpush1.bf16.msra.mxu0 0
    %265 = vmatprep.subr.bf16.mxu0 0
    %266 = vmatpush1.bf16.msra.mxu0 0
    %267 = vmatprep.subr.bf16.mxu0 0
    %268 = vmatpush1.bf16.msra.mxu0 0
    %269 = vmatprep.mubr.bf16.mxu0 0
    %270 = vmatmul.mubr.bf16.gmra.mrb[0].mxu0 %v165
    %v271 = vpop.f32.mrb[0].mxu0
    %v272 = vadd.f32 %v187, %v271
    %v273 = vpop.f32.mrb[0].mxu0
    %v274 = vpop.f32.mrb[0].mxu0
    %v275 = vpop.f32.mrb[0].mxu0
    %276 = vdwg.mxu0
    %v277 = vmax.f32 %v272, 0.0
    %v278 = vpack.c.bf16 %v277, %v277
    %v279 = vld [vmem:[#allocation7] sm:$0xf]
    %v280 = vld [vmem:[#allocation7 + $0x4] sm:$0xf]
    %v281 = vld [vmem:[#allocation7 + $0x8] sm:$0xf]
    %v282 = vld [vmem:[#allocation7 + $0xc] sm:$0xf]
    %v283 = vld [vmem:[#allocation7 + $0x10] sm:$0xf]
    %v284 = vld [vmem:[#allocation7 + $0x14] sm:$0xf]
    %v285 = vld [vmem:[#allocation7 + $0x18] sm:$0xf]
    %v286 = vld [vmem:[#allocation7 + $0x1c] sm:$0xf]
    %v287 = vld [vmem:[#allocation7 + $0x20] sm:$0xf]
    %v288 = vld [vmem:[#allocation7 + $0x24] sm:$0xf]
    %v289 = vld [vmem:[#allocation7 + $0x28] sm:$0xf]
    %v290 = vld [vmem:[#allocation7 + $0x2c] sm:$0xf]
    %v291 = vld [vmem:[#allocation7 + $0x30] sm:$0xf]
    %v292 = vld [vmem:[#allocation7 + $0x34] sm:$0xf]
    %v293 = vld [vmem:[#allocation7 + $0x38] sm:$0xf]
    %v294 = vld [vmem:[#allocation7 + $0x3c] sm:$0xf]
    %v295 = vld [vmem:[%s6] sm:$0x1]
    %v297 = vlaneseq
    %v298 = vshrl.u32 %v297, 7
    %v299 = vsub.s32 0, %v298
    %v300 = vrot.slane %v295, %v299
    %v318 = vunpack.c.l.b16 %v279
    %v319 = vunpack.c.l.b16 %v280
    %v320 = vunpack.c.l.b16 %v281
    %v321 = vunpack.c.l.b16 %v282
    %v322 = vunpack.c.l.b16 %v283
    %v323 = vunpack.c.l.b16 %v284
    %v324 = vunpack.c.l.b16 %v285
    %v325 = vunpack.c.l.b16 %v286
    %v326 = vunpack.c.l.b16 %v287
    %v327 = vunpack.c.l.b16 %v288
    %v328 = vunpack.c.l.b16 %v289
    %v329 = vunpack.c.l.b16 %v290
    %v330 = vunpack.c.l.b16 %v291
    %v331 = vunpack.c.l.b16 %v292
    %v332 = vunpack.c.l.b16 %v293
    %v333 = vunpack.c.l.b16 %v294
    %v334 = vpack.c.b16 %v319, %v318
    %v335 = vpack.c.b16 %v321, %v320
    %v336 = vpack.c.b16 %v323, %v322
    %v337 = vpack.c.b16 %v325, %v324
    %v338 = vpack.c.b16 %v327, %v326
    %v339 = vpack.c.b16 %v329, %v328
    %v340 = vpack.c.b16 %v331, %v330
    %v341 = vpack.c.b16 %v333, %v332
    %350 = vmatprep.subr.bf16.mxu0 0
    %351 = vmatpush1.bf16.msra.mxu0 %v334
    %352 = vmatprep.subr.bf16.mxu0 0
    %353 = vmatpush1.bf16.msra.mxu0 %v335
    %354 = vmatprep.subr.bf16.mxu0 0
    %355 = vmatpush1.bf16.msra.mxu0 %v336
    %356 = vmatprep.subr.bf16.mxu0 0
    %357 = vmatpush1.bf16.msra.mxu0 %v337
    %358 = vmatprep.subr.bf16.mxu0 0
    %359 = vmatpush1.bf16.msra.mxu0 %v338
    %360 = vmatprep.subr.bf16.mxu0 0
    %361 = vmatpush1.bf16.msra.mxu0 %v339
    %362 = vmatprep.subr.bf16.mxu0 0
    %363 = vmatpush1.bf16.msra.mxu0 %v340
    %364 = vmatprep.subr.bf16.mxu0 0
    %365 = vmatpush1.bf16.msra.mxu0 %v341
    %366 = vmatprep.subr.bf16.mxu0 0
    %367 = vmatpush1.bf16.msra.mxu0 0
    %368 = vmatprep.subr.bf16.mxu0 0
    %369 = vmatpush1.bf16.msra.mxu0 0
    %370 = vmatprep.subr.bf16.mxu0 0
    %371 = vmatpush1.bf16.msra.mxu0 0
    %372 = vmatprep.subr.bf16.mxu0 0
    %373 = vmatpush1.bf16.msra.mxu0 0
    %374 = vmatprep.subr.bf16.mxu0 0
    %375 = vmatpush1.bf16.msra.mxu0 0
    %376 = vmatprep.subr.bf16.mxu0 0
    %377 = vmatpush1.bf16.msra.mxu0 0
    %378 = vmatprep.subr.bf16.mxu0 0
    %379 = vmatpush1.bf16.msra.mxu0 0
    %380 = vmatprep.subr.bf16.mxu0 0
    %381 = vmatpush1.bf16.msra.mxu0 0
    %382 = vmatprep.mubr.bf16.mxu0 0
    %383 = vmatmul.mubr.bf16.gmra.mrb[0].mxu0 %v278
    %v384 = vpop.f32.mrb[0].mxu0
    %v385 = vadd.f32 %v300, %v384
    %v386 = vpop.f32.mrb[0].mxu0
    %v387 = vpop.f32.mrb[0].mxu0
    %v388 = vpop.f32.mrb[0].mxu0
    %389 = vdwg.mxu0
    %vm390 = vcmask 15360
    %391 = vst.msk [vmem:[%s7] sm:$0xff] %vm390, %v385
    // Predicated region
    $region46: #{tpu_custom_call.1} parent=1 // pred_check
      _
    $region47: #{tpu_custom_call.1} parent=1 // pred_check_branch
      %393 = sbr.rel (0) target = $region49
    $region48: #{tpu_custom_call.1} parent=1 // pred_region
      _
    $region49: #{tpu_custom_call.1} parent=1 // pred_fallthru
      _
    // Predicated region
    $region50: #{tpu_custom_call.1} parent=1 // pred_check
      _
    $region51: #{tpu_custom_call.1} parent=1 // pred_check_branch
      %395 = sbr.rel (0) target = $region53
    $region52: #{tpu_custom_call.1} parent=1 // pred_region
      _
    $region53: #{tpu_custom_call.1} parent=1 // pred_fallthru
      _
    %396 = vsyncpa [#allocation3], 1
    %397 = vsyncpa [#allocation5], 1
    %398 = vsyncpa [#allocation8], 1

</llo_original>
